<compile_context>
chip_gen: v6e
topology: v6e:2x2x1
jax: 0.10.0
libtpu: 0.0.40
codegen_flags: <defaults>
</compile_context>

<pallas_src>
import numpy as np
import jax
import jax.numpy as jnp
from jax import lax
from jax.experimental import pallas as pl
from jax.experimental.pallas import tpu as pltpu


# --------------------------------------------------------------------------
# Kernel: fused (3x3 conv + bias + ReLU) -> (1x1 conv + bias) for a block of
# `nb` whole images, with all matmuls batched across the block.
#   x_ref : [nb, H+2, (W+2)*Cin]   bf16 zero-padded input rows
#   w1_ref: [3, (W+2)*Cin, W*C1]   bf16 banded (block-Toeplitz) 3x3 weights
#   b1_ref: [1, W*C1]              f32  bias of conv-1, tiled over x
#   w2_ref: [W*C1, W*C2]           bf16 block-diagonal 1x1-head weights
#   b2_ref: [1, W*C2]              f32  bias of the head, tiled over x
#   o_ref : [nb, H, W*C2]          bf16 output rows (lane-dense, W*C2 >= 128)
# --------------------------------------------------------------------------
def _fused_head_kernel(x_ref, w1_ref, b1_ref, w2_ref, b2_ref, o_ref):
    nb, _, kp = x_ref.shape
    h = o_ref.shape[1]                      # output rows per image (= H)
    wc2 = o_ref.shape[2]

    # 3x3 conv as 3 banded matmuls.  Slice the bf16 INPUT (row window ky..ky+H
    # of every image), flatten the block to one big-M operand and let the MXU
    # result feed the f32 accumulator directly.
    xk = x_ref[:, 0:h, :].reshape(nb * h, kp)                       # bf16
    acc = jnp.dot(xk, w1_ref[0], preferred_element_type=jnp.float32)
    for ky in (1, 2):                                               # static, tiny
        xk = x_ref[:, ky:ky + h, :].reshape(nb * h, kp)
        acc = acc + jnp.dot(xk, w1_ref[ky], preferred_element_type=jnp.float32)

    # bias + ReLU, then drop to bf16 for the head matmul (f32 accumulation).
    hidden = jnp.maximum(acc + b1_ref[...], 0.0).astype(jnp.bfloat16)

    out = jnp.dot(hidden, w2_ref[...], preferred_element_type=jnp.float32)
    out = out + b2_ref[...]                                         # [nb*H, W*C2]
    o_ref[...] = out.reshape(nb, h, wc2).astype(o_ref.dtype)        # bf16 store


# --------------------------------------------------------------------------
# Host-side weight re-packing (pure layout work, done once under jit).
# --------------------------------------------------------------------------
def _conv3x3_band_weights(w1_hwio, W, Cin, C1):
    """[3, 3, Cin, C1] -> [3, (W+2)*Cin, W*C1] block-Toeplitz matmul weights.

    band[ky, (x+kx)*Cin + cin, x*C1 + c1] = w1_hwio[ky, kx, cin, c1]
    """
    P = W + 2
    p = jnp.arange(P)[:, None]                 # padded column index
    x = jnp.arange(W)[None, :]                 # output column index
    kx = p - x                                 # [P, W]
    valid = (kx >= 0) & (kx < 3)
    kxc = jnp.clip(kx, 0, 2)
    g = w1_hwio[:, kxc, :, :]                  # [3, P, W, Cin, C1]
    g = jnp.where(valid[None, :, :, None, None], g, 0.0)
    g = jnp.transpose(g, (0, 1, 3, 2, 4))      # [3, P, Cin, W, C1]
    return g.reshape(3, P * Cin, W * C1)


def _images_per_block(n, h, w, cin, c2, *, target_pixels=65536,
                      vmem_budget_bytes=12 * 1024 * 1024):
    """Images per grid step.

    Large enough to amortize the ~0.35us per-step pipeline overhead
    (~target_pixels output pixels), capped by a conservative double-buffered
    VMEM budget (safe under v5e's 16 MiB scoped default) and, when N >= 2,
    capped to keep >= 2 grid steps so the 'parallel' axis can use both
    TensorCores on v7x.
    """
    kp = (w + 2) * cin
    per_img = 2 * ((h + 2) * kp * 2 + h * w * c2 * 2)   # 2x-buffered bf16 in + out
    nb = min(max(1, target_pixels // max(1, h * w)),
             max(1, vmem_budget_bytes // per_img))
    nb = min(nb, n)
    if n >= 2:
        nb = min(nb, -(-n // 2))                         # keep grid length >= 2
    return max(1, nb)


def change_head_forward(x_nchw, w1, b1, w2, b2):
    """x_nchw: [N, Cin, H, W] f32. Returns [N, C2, H, W] f32."""
    N, Cin, H, W = x_nchw.shape
    C1 = w1.shape[0]
    C2 = w2.shape[0]
    KP = (W + 2) * Cin          # padded-row width (input minor dim)
    WC1 = W * C1                # hidden minor dim (= 128 at demo shapes)
    WC2 = W * C2                # output minor dim (= 160 >= 128, lane-dense)

    # ---- glue: NCHW -> NHWC -> zero-pad -> row strips (no im2col blow-up) ----
    x_nhwc = jnp.transpose(x_nchw, (0, 2, 3, 1))                    # [N,H,W,Cin]
    x_pad = jnp.pad(x_nhwc, ((0, 0), (1, 1), (1, 1), (0, 0)))       # [N,H+2,W+2,Cin]
    x_rows = x_pad.reshape(N, H + 2, KP).astype(jnp.bfloat16)       # bf16 HBM read

    # ---- weights as banded / block-diagonal matmul operands ----
    w1_hwio = jnp.transpose(w1, (2, 3, 1, 0))                       # [3,3,Cin,C1]
    w1_band = _conv3x3_band_weights(w1_hwio, W, Cin, C1).astype(jnp.bfloat16)
    w2_mat = jnp.transpose(w2[:, :, 0, 0], (1, 0)).astype(jnp.float32)   # [C1,C2]
    w2_bd = jnp.kron(jnp.eye(W, dtype=jnp.float32), w2_mat).astype(jnp.bfloat16)
    b1_t = jnp.tile(b1.astype(jnp.float32), W).reshape(1, WC1)
    b2_t = jnp.tile(b2.astype(jnp.float32), W).reshape(1, WC2)

    # ---- blocking: large image blocks, ragged tail handled by padding N ----
    nb = _images_per_block(N, H, W, Cin, C2)
    grid_n = pl.cdiv(N, nb)
    n_pad = grid_n * nb
    if n_pad != N:
        x_rows = jnp.pad(x_rows, ((0, n_pad - N), (0, 0), (0, 0)))

    cost = pl.CostEstimate(
        flops=2 * n_pad * H * W * (9 * Cin * C1 + C1 * C2),
        transcendentals=0,
        bytes_accessed=(x_rows.size * 2 + n_pad * H * WC2 * 2
                        + w1_band.size * 2 + w2_bd.size * 2 + (WC1 + WC2) * 4),
    )

    out_rows = pl.pallas_call(
        _fused_head_kernel,
        out_shape=jax.ShapeDtypeStruct((n_pad, H, WC2), jnp.bfloat16),
        grid_spec=pltpu.PrefetchScalarGridSpec(
            num_scalar_prefetch=0,
            grid=(grid_n,),
            in_specs=[
                pl.BlockSpec((nb, H + 2, KP), lambda i: (i, 0, 0)),   # input strip
                pl.BlockSpec((3, KP, WC1), lambda i: (0, 0, 0)),      # banded W1
                pl.BlockSpec((1, WC1), lambda i: (0, 0)),             # b1 (tiled)
                pl.BlockSpec((WC1, WC2), lambda i: (0, 0)),           # block-diag W2
                pl.BlockSpec((1, WC2), lambda i: (0, 0)),             # b2 (tiled)
            ],
            out_specs=pl.BlockSpec((nb, H, WC2), lambda i: (i, 0, 0)),
        ),
        compiler_params=pltpu.CompilerParams(
            dimension_semantics=("parallel",),   # megacore sharding on v7x
        ),
        cost_estimate=cost,
    )(x_rows, w1_band, b1_t, w2_bd, b2_t)

    # ---- glue: drop padded images, [N, H, W*C2] -> NHWC -> NCHW (f32 out) ----
    out = out_rows[:N].astype(jnp.float32).reshape(N, H, W, C2)
    return jnp.transpose(out, (0, 3, 1, 2))                          # [N, C2, H, W]


def _reference(x_nchw, w1, b1, w2, b2):
    dn = ("NCHW", "OIHW", "NCHW")
    f = lax.conv_general_dilated(x_nchw, w1, (1, 1), "SAME", dimension_numbers=dn)
    f = jnp.maximum(f + b1[None, :, None, None], 0.0)
    o = lax.conv_general_dilated(f, w2, (1, 1), "SAME", dimension_numbers=dn)
    return o + b2[None, :, None, None]


if __name__ == "__main__":
    N, Cin, H, W = 2, 4, 16, 16
    C1, C2 = 8, 10

    key = jax.random.PRNGKey(0)
    k_x, k_w1, k_b1, k_w2, k_b2 = jax.random.split(key, 5)

    x = jax.random.normal(k_x, (N, Cin, H, W), dtype=jnp.float32)
    # Deterministic synthetic parameters (PyTorch Conv2d weight layout OIHW).
    w1 = jax.random.normal(k_w1, (C1, Cin, 3, 3), dtype=jnp.float32) * 0.1
    b1 = jax.random.normal(k_b1, (C1,), dtype=jnp.float32) * 0.1
    w2 = jax.random.normal(k_w2, (C2, C1, 1, 1), dtype=jnp.float32) * 0.1
    b2 = jax.random.normal(k_b2, (C2,), dtype=jnp.float32) * 0.1

    out = jax.block_until_ready(jax.jit(change_head_forward)(x, w1, b1, w2, b2))
    ref = jax.block_until_ready(_reference(x, w1, b1, w2, b2))

    assert out.shape == (N, C2, H, W), out.shape
    # bf16 operands + bf16 output store (f32 accumulation) -> looser tolerance.
    np.testing.assert_allclose(np.asarray(out), np.asarray(ref), rtol=3e-2, atol=3e-2)

    print("KERNEL_OK")
</pallas_src>

<mosaic_0001>
module attributes {stable_mosaic.version = 11 : i64} {
  func.func @_fused_head_kernel(%arg0: i32, %arg1: memref<1x18x72xbf16, #tpu.memory_space<vmem>>, %arg2: memref<3x72x128xbf16, #tpu.memory_space<vmem>>, %arg3: memref<1x128xf32, #tpu.memory_space<vmem>>, %arg4: memref<128x160xbf16, #tpu.memory_space<vmem>>, %arg5: memref<1x160xf32, #tpu.memory_space<vmem>>, %arg6: memref<1x16x160xbf16, #tpu.memory_space<vmem>>) attributes {dimension_semantics = [#tpu.dimension_semantics<parallel>], iteration_bounds = array<i64: 2>, scalar_prefetch = 0 : i64, scratch_operands = 0 : i64, tpu.core_type = #tpu.core_type<tc>, window_params = [{transform_indices = @transform_0, window_bounds = array<i64: 1, 18, 72>}, {pipeline_mode = #tpu.pipeline_mode<synchronous>, transform_indices = @transform_1, window_bounds = array<i64: 3, 72, 128>}, {pipeline_mode = #tpu.pipeline_mode<synchronous>, transform_indices = @transform_2, window_bounds = array<i64: 1, 128>}, {pipeline_mode = #tpu.pipeline_mode<synchronous>, transform_indices = @transform_3, window_bounds = array<i64: 128, 160>}, {pipeline_mode = #tpu.pipeline_mode<synchronous>, transform_indices = @transform_4, window_bounds = array<i64: 1, 160>}, {transform_indices = @transform_5, window_bounds = array<i64: 1, 16, 160>}]} {
    %c0 = arith.constant 0 : index
    %c0_0 = arith.constant 0 : index
    %c0_1 = arith.constant 0 : index
    %0 = vector.load %arg1[%c0, %c0_0, %c0_1] : memref<1x18x72xbf16, #tpu.memory_space<vmem>>, vector<1x16x72xbf16>
    %1 = vector.shape_cast %0 : vector<1x16x72xbf16> to vector<16x72xbf16>
    %c0_2 = arith.constant 0 : index
    %c0_3 = arith.constant 0 : index
    %c0_4 = arith.constant 0 : index
    %2 = vector.load %arg2[%c0_2, %c0_3, %c0_4] : memref<3x72x128xbf16, #tpu.memory_space<vmem>>, vector<1x72x128xbf16>
    %3 = vector.shape_cast %2 : vector<1x72x128xbf16> to vector<72x128xbf16>
    %cst = arith.constant dense<0.000000e+00> : vector<16x128xf32>
    %4 = tpu.matmul %1, %3, %cst {dimension_numbers = #tpu.dot_dimension_numbers<[1], [0], [0], [1], [0, 0, 1, 1], [], []>} : vector<16x72xbf16>, vector<72x128xbf16>, vector<16x128xf32> -> vector<16x128xf32>
    %c0_5 = arith.constant 0 : index
    %c1 = arith.constant 1 : index
    %c0_6 = arith.constant 0 : index
    %5 = vector.load %arg1[%c0_5, %c1, %c0_6] : memref<1x18x72xbf16, #tpu.memory_space<vmem>>, vector<1x16x72xbf16>
    %6 = vector.shape_cast %5 : vector<1x16x72xbf16> to vector<16x72xbf16>
    %c1_7 = arith.constant 1 : index
    %c0_8 = arith.constant 0 : index
    %c0_9 = arith.constant 0 : index
    %7 = vector.load %arg2[%c1_7, %c0_8, %c0_9] : memref<3x72x128xbf16, #tpu.memory_space<vmem>>, vector<1x72x128xbf16>
    %8 = vector.shape_cast %7 : vector<1x72x128xbf16> to vector<72x128xbf16>
    %cst_10 = arith.constant dense<0.000000e+00> : vector<16x128xf32>
    %9 = tpu.matmul %6, %8, %cst_10 {dimension_numbers = #tpu.dot_dimension_numbers<[1], [0], [0], [1], [0, 0, 1, 1], [], []>} : vector<16x72xbf16>, vector<72x128xbf16>, vector<16x128xf32> -> vector<16x128xf32>
    %10 = arith.addf %4, %9 : vector<16x128xf32>
    %c0_11 = arith.constant 0 : index
    %c2 = arith.constant 2 : index
    %c0_12 = arith.constant 0 : index
    %11 = vector.load %arg1[%c0_11, %c2, %c0_12] : memref<1x18x72xbf16, #tpu.memory_space<vmem>>, vector<1x16x72xbf16>
    %12 = vector.shape_cast %11 : vector<1x16x72xbf16> to vector<16x72xbf16>
    %c2_13 = arith.constant 2 : index
    %c0_14 = arith.constant 0 : index
    %c0_15 = arith.constant 0 : index
    %13 = vector.load %arg2[%c2_13, %c0_14, %c0_15] : memref<3x72x128xbf16, #tpu.memory_space<vmem>>, vector<1x72x128xbf16>
    %14 = vector.shape_cast %13 : vector<1x72x128xbf16> to vector<72x128xbf16>
    %cst_16 = arith.constant dense<0.000000e+00> : vector<16x128xf32>
    %15 = tpu.matmul %12, %14, %cst_16 {dimension_numbers = #tpu.dot_dimension_numbers<[1], [0], [0], [1], [0, 0, 1, 1], [], []>} : vector<16x72xbf16>, vector<72x128xbf16>, vector<16x128xf32> -> vector<16x128xf32>
    %16 = arith.addf %10, %15 : vector<16x128xf32>
    %c0_17 = arith.constant 0 : index
    %c0_18 = arith.constant 0 : index
    %17 = vector.load %arg3[%c0_17, %c0_18] : memref<1x128xf32, #tpu.memory_space<vmem>>, vector<1x128xf32>
    %18 = vector.broadcast %17 : vector<1x128xf32> to vector<16x128xf32>
    %19 = arith.addf %16, %18 : vector<16x128xf32>
    %cst_19 = arith.constant 0.000000e+00 : f32
    %20 = vector.broadcast %cst_19 : f32 to vector<16x128xf32>
    %21 = arith.maximumf %19, %20 : vector<16x128xf32>
    %22 = arith.truncf %21 : vector<16x128xf32> to vector<16x128xbf16>
    %c0_20 = arith.constant 0 : index
    %c0_21 = arith.constant 0 : index
    %23 = vector.load %arg4[%c0_20, %c0_21] : memref<128x160xbf16, #tpu.memory_space<vmem>>, vector<128x160xbf16>
    %cst_22 = arith.constant dense<0.000000e+00> : vector<16x160xf32>
    %24 = tpu.matmul %22, %23, %cst_22 {dimension_numbers = #tpu.dot_dimension_numbers<[1], [0], [0], [1], [0, 0, 1, 1], [], []>} : vector<16x128xbf16>, vector<128x160xbf16>, vector<16x160xf32> -> vector<16x160xf32>
    %c0_23 = arith.constant 0 : index
    %c0_24 = arith.constant 0 : index
    %25 = vector.load %arg5[%c0_23, %c0_24] : memref<1x160xf32, #tpu.memory_space<vmem>>, vector<1x160xf32>
    %26 = vector.broadcast %25 : vector<1x160xf32> to vector<16x160xf32>
    %27 = arith.addf %24, %26 : vector<16x160xf32>
    %28 = vector.shape_cast %27 : vector<16x160xf32> to vector<1x16x160xf32>
    %29 = arith.truncf %28 : vector<1x16x160xf32> to vector<1x16x160xbf16>
    %c0_25 = arith.constant 0 : index
    %c0_26 = arith.constant 0 : index
    %c0_27 = arith.constant 0 : index
    %30 = vector.load %arg6[%c0_25, %c0_26, %c0_27] : memref<1x16x160xbf16, #tpu.memory_space<vmem>>, vector<1x16x160xbf16>
    tpu.vector_store %arg6[%c0_25, %c0_26, %c0_27], %29 {strides = array<i32>} : memref<1x16x160xbf16, #tpu.memory_space<vmem>>, vector<1x16x160xbf16>,
    return
  }
  func.func @transform_0(%arg0: i32) -> (i32, i32, i32) {
    %c0_i32 = arith.constant 0 : i32
    %c0_i32_0 = arith.constant 0 : i32
    %c0_i32_1 = arith.constant 0 : i32
    return %arg0, %c0_i32, %c0_i32_0 : i32, i32, i32
  }
  func.func @transform_1(%arg0: i32) -> (i32, i32, i32) {
    %c0_i32 = arith.constant 0 : i32
    %c0_i32_0 = arith.constant 0 : i32
    %c0_i32_1 = arith.constant 0 : i32
    %c0_i32_2 = arith.constant 0 : i32
    return %c0_i32, %c0_i32_0, %c0_i32_1 : i32, i32, i32
  }
  func.func @transform_2(%arg0: i32) -> (i32, i32) {
    %c0_i32 = arith.constant 0 : i32
    %c0_i32_0 = arith.constant 0 : i32
    %c0_i32_1 = arith.constant 0 : i32
    return %c0_i32, %c0_i32_0 : i32, i32
  }
  func.func @transform_3(%arg0: i32) -> (i32, i32) {
    %c0_i32 = arith.constant 0 : i32
    %c0_i32_0 = arith.constant 0 : i32
    %c0_i32_1 = arith.constant 0 : i32
    return %c0_i32, %c0_i32_0 : i32, i32
  }
  func.func @transform_4(%arg0: i32) -> (i32, i32) {
    %c0_i32 = arith.constant 0 : i32
    %c0_i32_0 = arith.constant 0 : i32
    %c0_i32_1 = arith.constant 0 : i32
    return %c0_i32, %c0_i32_0 : i32, i32
  }
  func.func @transform_5(%arg0: i32) -> (i32, i32, i32) {
    %c0_i32 = arith.constant 0 : i32
    %c0_i32_0 = arith.constant 0 : i32
    %c0_i32_1 = arith.constant 0 : i32
    return %arg0, %c0_i32, %c0_i32_0 : i32, i32, i32
  }
}

</mosaic_0001>

<llo_original>
// kernel: tile.18
$region0: #{tile.18}
  #allocation0 [shape = 's32[1]{0}', space=sflag, size = 0x4, scoped, tag = 'scoped memory for tile.18']
  %s0 = inlined_call_operand.vmem [shape: f32[10], index: 0, kind: input, shape index: {}]
  %s1 = inlined_call_operand.vmem [shape: f32[16,10], index: 1, kind: output, shape index: {}]
  // Predicated region
  $region2: #{tile.18} parent=0 // pred_check
    _
  $region3: #{tile.18} parent=0 // pred_check_branch
    %3 = sbr.rel (0) target = $region5
  $region4: #{tile.18} parent=0 // pred_region
    _
  $region5: #{tile.18} parent=0 // pred_fallthru
    _
  %v4 = vld [vmem:[%s0] ss:$0 sm:$0xff]
  %5 = vst [vmem:[%s1] sm:$0xff] %v4
  %s6 = scalar_lea.vmem %s1, 8
  %7 = vst [vmem:[%s6] sm:$0xff] %v4

// kernel: tile.19
$region0: #{tile.19}
  %s0 = inlined_call_operand.vmem [shape: f32[16,10], index: 0, kind: input, shape index: {}]
  %s1 = inlined_call_operand.vmem [shape: f32[1,160], index: 1, kind: output, shape index: {}]
  $region1: #{tile.19} parent=0
    #allocation0 [shape = 'u8[8192]{0}', space=vmem, size = 0x2000, scoped, tag = 'scoped mem for output reshape']
    %v2 = vld [vmem:[%s0] sm:$0x1]
    %vm3 = vcmask 80896
    %4 = vst.msk [vmem:[#allocation0] sm:$0x1] %vm3, %v2
    %s5 = scalar_lea.vmem %s0, 12
    %v6 = vld [vmem:[%s5] sm:$0x1]
    %s7 = scalar_lea.vmem %s0, 12
    %v8 = vld [vmem:[%s7] sm:$0x1]
    %vm9 = vcmask 64512
    %v10 = vsel %vm9, %v8, %v6
    %11 = vrot.lane.b32.xlu0 %v10, 120
    %v12 = vpop.permute.xlu0 %11
    %vm13 = vcmask 15360
    %s14 = scalar_lea.vmem [#allocation0], 8
    %15 = vst.msk [vmem:[%s14] sm:$0x1] %vm13, %v12
    %vm16 = vcmask 1048512
    %17 = vst.msk [vmem:[#allocation0] sm:$0x1] %vm16, %v12
    %s18 = scalar_lea.vmem %s0, 11
    %v19 = vld [vmem:[%s18] sm:$0x1]
    %20 = vrot.lane.b32.xlu0 %v19, 110
    %v21 = vpop.permute.xlu0 %20
    %vm22 = vcmask 982896
    %23 = vst.msk [vmem:[#allocation0] sm:$0x1] %vm22, %v21
    %s24 = scalar_lea.vmem %s0, 10
    %v25 = vld [vmem:[%s24] sm:$0x1]
    %26 = vrot.lane.b32.xlu0 %v25, 100
    %v27 = vpop.permute.xlu0 %26
    %vm28 = vcmask 900896
    %29 = vst.msk [vmem:[#allocation0] sm:$0x1] %vm28, %v27
    %s30 = scalar_lea.vmem %s0, 9
    %v31 = vld [vmem:[%s30] sm:$0x1]
    %32 = vrot.lane.b32.xlu0 %v31, 90
    %v33 = vpop.permute.xlu0 %32
    %vm34 = vcmask 818896
    %35 = vst.msk [vmem:[#allocation0] sm:$0x1] %vm34, %v33
    %s36 = scalar_lea.vmem %s0, 8
    %v37 = vld [vmem:[%s36] sm:$0x1]
    %38 = vrot.lane.b32.xlu0 %v37, 80
    %v39 = vpop.permute.xlu0 %38
    %vm40 = vcmask 736896
    %41 = vst.msk [vmem:[#allocation0] sm:$0x1] %vm40, %v39
    %s42 = scalar_lea.vmem %s0, 7
    %v43 = vld [vmem:[%s42] sm:$0x1]
    %44 = vrot.lane.b32.xlu0 %v43, 70
    %v45 = vpop.permute.xlu0 %44
    %vm46 = vcmask 654896
    %47 = vst.msk [vmem:[#allocation0] sm:$0x1] %vm46, %v45
    %s48 = scalar_lea.vmem %s0, 6
    %v49 = vld [vmem:[%s48] sm:$0x1]
    %50 = vrot.lane.b32.xlu0 %v49, 60
    %v51 = vpop.permute.xlu0 %50
    %vm52 = vcmask 572896
    %53 = vst.msk [vmem:[#allocation0] sm:$0x1] %vm52, %v51
    %s54 = scalar_lea.vmem %s0, 5
    %v55 = vld [vmem:[%s54] sm:$0x1]
    %56 = vrot.lane.b32.xlu0 %v55, 50
    %v57 = vpop.permute.xlu0 %56
    %vm58 = vcmask 490896
    %59 = vst.msk [vmem:[#allocation0] sm:$0x1] %vm58, %v57
    %s60 = scalar_lea.vmem %s0, 4
    %v61 = vld [vmem:[%s60] sm:$0x1]
    %62 = vrot.lane.b32.xlu0 %v61, 40
    %v63 = vpop.permute.xlu0 %62
    %vm64 = vcmask 408896
    %65 = vst.msk [vmem:[#allocation0] sm:$0x1] %vm64, %v63
    %s66 = scalar_lea.vmem %s0, 3
    %v67 = vld [vmem:[%s66] sm:$0x1]
    %68 = vrot.lane.b32.xlu0 %v67, 30
    %v69 = vpop.permute.xlu0 %68
    %vm70 = vcmask 326896
    %71 = vst.msk [vmem:[#allocation0] sm:$0x1] %vm70, %v69
    %s72 = scalar_lea.vmem %s0, 15
    %v73 = vld [vmem:[%s72] sm:$0x1]
    %74 = vrot.lane.b32.xlu0 %v73, 22
    %v75 = vpop.permute.xlu0 %74
    %vm76 = vcmask 261296
    %s77 = scalar_lea.vmem [#allocation0], 8
    %78 = vst.msk [vmem:[%s77] sm:$0x1] %vm76, %v75
    %s79 = scalar_lea.vmem %s0, 2
    %v80 = vld [vmem:[%s79] sm:$0x1]
    %81 = vrot.lane.b32.xlu0 %v80, 20
    %v82 = vpop.permute.xlu0 %81
    %vm83 = vcmask 244896
    %84 = vst.msk [vmem:[#allocation0] sm:$0x1] %vm83, %v82
    %s85 = scalar_lea.vmem %s0, 14
    %v86 = vld [vmem:[%s85] sm:$0x1]
    %87 = vrot.lane.b32.xlu0 %v86, 12
    %v88 = vpop.permute.xlu0 %87
    %vm89 = vcmask 179296
    %s90 = scalar_lea.vmem [#allocation0], 8
    %91 = vst.msk [vmem:[%s90] sm:$0x1] %vm89, %v88
    %s92 = scalar_lea.vmem %s0, 1
    %v93 = vld [vmem:[%s92] sm:$0x1]
    %94 = vrot.lane.b32.xlu0 %v93, 10
    %v95 = vpop.permute.xlu0 %94
    %vm96 = vcmask 162896
    %97 = vst.msk [vmem:[#allocation0] sm:$0x1] %vm96, %v95
    %s98 = scalar_lea.vmem %s0, 13
    %v99 = vld [vmem:[%s98] sm:$0x1]
    %100 = vrot.lane.b32.xlu0 %v99, 2
    %v101 = vpop.permute.xlu0 %100
    %vm102 = vcmask 97296
    %s103 = scalar_lea.vmem [#allocation0], 8
    %104 = vst.msk [vmem:[%s103] sm:$0x1] %vm102, %v101
    %s106 = sshll.u32 1, 1
    %s107 = ssub.s32 %s106, 1
    %v109 = vld [vmem:[#allocation0] sm:%s107]
    %s110 = sshll.u32 1, 1
    %s111 = ssub.s32 %s110, 1
    %112 = vst [vmem:[%s1] sm:%s111] %v109
    %s113 = scalar_lea.vmem [#allocation0], 8
    %v114 = vld [vmem:[%s113] sm:%s107]
    %s115 = sshll.u32 1, 1
    %s116 = ssub.s32 %s115, 1
    %s117 = scalar_lea.vmem %s1, 1
    %118 = vst [vmem:[%s117] sm:%s116] %v114

// kernel: tile.13
$region0: #{tile.13}
  #allocation0 [shape = 's32[1]{0}', space=sflag, size = 0x4, scoped, tag = 'scoped memory for tile.13']
  %s0 = inlined_call_operand.vmem [shape: f32[8], index: 0, kind: input, shape index: {}]
  %s1 = inlined_call_operand.vmem [shape: f32[16,8], index: 1, kind: output, shape index: {}]
  // Predicated region
  $region2: #{tile.13} parent=0 // pred_check
    _
  $region3: #{tile.13} parent=0 // pred_check_branch
    %3 = sbr.rel (0) target = $region5
  $region4: #{tile.13} parent=0 // pred_region
    _
  $region5: #{tile.13} parent=0 // pred_fallthru
    _
  %v4 = vld [vmem:[%s0] ss:$0 sm:$0xff]
  %5 = vst [vmem:[%s1] sm:$0xff] %v4
  %s6 = scalar_lea.vmem %s1, 8
  %7 = vst [vmem:[%s6] sm:$0xff] %v4

// kernel: tile.14
$region0: #{tile.14}
  %s0 = inlined_call_operand.vmem [shape: f32[16,8], index: 0, kind: input, shape index: {}]
  %s1 = inlined_call_operand.vmem [shape: f32[1,128], index: 1, kind: output, shape index: {}]
  $region1: #{tile.14} parent=0
    #allocation0 [shape = 'u8[4096]{0}', space=vmem, size = 0x1000, scoped, tag = 'scoped mem for output reshape']
    %v2 = vld [vmem:[%s0] sm:$0x1]
    %vm3 = vcmask 64512
    %4 = vst.msk [vmem:[#allocation0] sm:$0x1] %vm3, %v2
    %s5 = scalar_lea.vmem %s0, 15
    %v6 = vld [vmem:[%s5] sm:$0x1]
    %7 = vrot.lane.b32.xlu0 %v6, 120
    %v8 = vpop.permute.xlu0 %7
    %vm9 = vcmask 1048512
    %10 = vst.msk [vmem:[#allocation0] sm:$0x1] %vm9, %v8
    %s11 = scalar_lea.vmem %s0, 14
    %v12 = vld [vmem:[%s11] sm:$0x1]
    %13 = vrot.lane.b32.xlu0 %v12, 112
    %v14 = vpop.permute.xlu0 %13
    %vm15 = vcmask 982912
    %16 = vst.msk [vmem:[#allocation0] sm:$0x1] %vm15, %v14
    %s17 = scalar_lea.vmem %s0, 13
    %v18 = vld [vmem:[%s17] sm:$0x1]
    %19 = vrot.lane.b32.xlu0 %v18, 104
    %v20 = vpop.permute.xlu0 %19
    %vm21 = vcmask 917312
    %22 = vst.msk [vmem:[#allocation0] sm:$0x1] %vm21, %v20
    %s23 = scalar_lea.vmem %s0, 12
    %v24 = vld [vmem:[%s23] sm:$0x1]
    %25 = vrot.lane.b32.xlu0 %v24, 96
    %v26 = vpop.permute.xlu0 %25
    %vm27 = vcmask 851712
    %28 = vst.msk [vmem:[#allocation0] sm:$0x1] %vm27, %v26
    %s29 = scalar_lea.vmem %s0, 11
    %v30 = vld [vmem:[%s29] sm:$0x1]
    %31 = vrot.lane.b32.xlu0 %v30, 88
    %v32 = vpop.permute.xlu0 %31
    %vm33 = vcmask 786112
    %34 = vst.msk [vmem:[#allocation0] sm:$0x1] %vm33, %v32
    %s35 = scalar_lea.vmem %s0, 10
    %v36 = vld [vmem:[%s35] sm:$0x1]
    %37 = vrot.lane.b32.xlu0 %v36, 80
    %v38 = vpop.permute.xlu0 %37
    %vm39 = vcmask 720512
    %40 = vst.msk [vmem:[#allocation0] sm:$0x1] %vm39, %v38
    %s41 = scalar_lea.vmem %s0, 9
    %v42 = vld [vmem:[%s41] sm:$0x1]
    %43 = vrot.lane.b32.xlu0 %v42, 72
    %v44 = vpop.permute.xlu0 %43
    %vm45 = vcmask 654912
    %46 = vst.msk [vmem:[#allocation0] sm:$0x1] %vm45, %v44
    %s47 = scalar_lea.vmem %s0, 8
    %v48 = vld [vmem:[%s47] sm:$0x1]
    %49 = vrot.lane.b32.xlu0 %v48, 64
    %v50 = vpop.permute.xlu0 %49
    %vm51 = vcmask 589312
    %52 = vst.msk [vmem:[#allocation0] sm:$0x1] %vm51, %v50
    %s53 = scalar_lea.vmem %s0, 7
    %v54 = vld [vmem:[%s53] sm:$0x1]
    %55 = vrot.lane.b32.xlu0 %v54, 56
    %v56 = vpop.permute.xlu0 %55
    %vm57 = vcmask 523712
    %58 = vst.msk [vmem:[#allocation0] sm:$0x1] %vm57, %v56
    %s59 = scalar_lea.vmem %s0, 6
    %v60 = vld [vmem:[%s59] sm:$0x1]
    %61 = vrot.lane.b32.xlu0 %v60, 48
    %v62 = vpop.permute.xlu0 %61
    %vm63 = vcmask 458112
    %64 = vst.msk [vmem:[#allocation0] sm:$0x1] %vm63, %v62
    %s65 = scalar_lea.vmem %s0, 5
    %v66 = vld [vmem:[%s65] sm:$0x1]
    %67 = vrot.lane.b32.xlu0 %v66, 40
    %v68 = vpop.permute.xlu0 %67
    %vm69 = vcmask 392512
    %70 = vst.msk [vmem:[#allocation0] sm:$0x1] %vm69, %v68
    %s71 = scalar_lea.vmem %s0, 4
    %v72 = vld [vmem:[%s71] sm:$0x1]
    %73 = vrot.lane.b32.xlu0 %v72, 32
    %v74 = vpop.permute.xlu0 %73
    %vm75 = vcmask 326912
    %76 = vst.msk [vmem:[#allocation0] sm:$0x1] %vm75, %v74
    %s77 = scalar_lea.vmem %s0, 3
    %v78 = vld [vmem:[%s77] sm:$0x1]
    %79 = vrot.lane.b32.xlu0 %v78, 24
    %v80 = vpop.permute.xlu0 %79
    %vm81 = vcmask 261312
    %82 = vst.msk [vmem:[#allocation0] sm:$0x1] %vm81, %v80
    %s83 = scalar_lea.vmem %s0, 2
    %v84 = vld [vmem:[%s83] sm:$0x1]
    %85 = vrot.lane.b32.xlu0 %v84, 16
    %v86 = vpop.permute.xlu0 %85
    %vm87 = vcmask 195712
    %88 = vst.msk [vmem:[#allocation0] sm:$0x1] %vm87, %v86
    %s89 = scalar_lea.vmem %s0, 1
    %v90 = vld [vmem:[%s89] sm:$0x1]
    %91 = vrot.lane.b32.xlu0 %v90, 8
    %v92 = vpop.permute.xlu0 %91
    %vm93 = vcmask 130112
    %94 = vst.msk [vmem:[#allocation0] sm:$0x1] %vm93, %v92
    %s96 = sshll.u32 1, 1
    %s97 = ssub.s32 %s96, 1
    %v99 = vld [vmem:[#allocation0] sm:%s97]
    %s100 = sshll.u32 1, 1
    %s101 = ssub.s32 %s100, 1
    %102 = vst [vmem:[%s1] sm:%s101] %v99

// kernel: change_head_forward.1
$region0: #{change_head_forward.1}
  #allocation0 [shape = 'u32[]', space=smem, size = 0x4, offset = 0x4, fixed_abs, tag = 'smem constant byte address 0x4 - core index']
  #allocation1 [shape = 'u32[144,128]{1,0:T(1,128)}', space=vmem, size = 0x12000, scoped, tag = 'internal scratch']
  %s0 = inlined_call_operand.vmem [shape: bf16[2,18,72], index: 0, kind: input, shape index: {}]
  %s1 = inlined_call_operand.vmem [shape: bf16[3,72,128], index: 1, kind: input, shape index: {}]
  %s2 = inlined_call_operand.vmem [shape: f32[1,128], index: 2, kind: input, shape index: {}]
  %s3 = inlined_call_operand.vmem [shape: bf16[128,160], index: 3, kind: input, shape index: {}]
  %s4 = inlined_call_operand.vmem [shape: f32[1,160], index: 4, kind: input, shape index: {}]
  %s5 = inlined_call_operand.vmem [shape: bf16[2,16,160], index: 5, kind: output, shape index: {}]
  %s6 = sld [smem:[#allocation0]]
  $region53: #{change_head_forward.1} parent=0
    _
  %s8 = ssub.s32 1, %s6
  %s9 = scalar_select 0, %s8, %s6
  loop: start=0, step=1, limit=4
  $region2: #{change_head_forward.1} parent=0 // loop_pre_header
    _
  $region3: #{change_head_forward.1} parent=0 // loop_header
    %s11 = sphi 0, %s15
    %p12 = scmp.ge.s32.totalorder %s11, 4
    %s21 = sphi 0, %s23
    %s24 = sphi 0, %s21
    %s25 = sphi 0, %s24
    %s41 = sphi 0, %s25
    %s45 = sphi 0, %s45
    %s47 = sphi 0, %s45
    %s48 = sphi 0, %s47
    %s62 = sphi 0, %s48
    %s66 = sphi 0, %s66
    %s68 = sphi 0, %s66
    %s69 = sphi 0, %s68
    %s83 = sphi 0, %s69
    %s87 = sphi 0, %s87
    %s89 = sphi 0, %s87
    %s90 = sphi 0, %s89
    %s104 = sphi 0, %s90
    %s108 = sphi 0, %s108
    %s110 = sphi 0, %s108
    %s111 = sphi 0, %s110
    %s125 = sphi 0, %s111
    %s131 = sphi 0, %s133
    %s134 = sphi 0, %s131
    %s135 = sphi 0, %s134
    %s151 = sphi 0, %s135
  $region4: #{change_head_forward.1} parent=0 // loop_header_branch
    %14 = sbr.rel (%p12) target = $region8
  $region5: #{change_head_forward.1} parent=0 // loop_body
    %s16 = ssub.s32 %s11, 1
    %s17 = ssub.s32 %s11, 2
    %s18 = sadd.s32 %s11, 1
    %s19 = ssub.s32 %s11, %s18
    %p20 = scmp.eq.s32.totalorder %s19, 0
    %s22 = sadd.s32 %s21, 1
    %s23 = scalar_select %p20, %s21, %s22
    %p26 = pneg %p20
    %p27 = scmp.eq.s32.totalorder %s11, 1
    %p28 = por %p26, %p27
    %p29 = scmp.ne.s32.totalorder %s21, %s24
    %p30 = scmp.eq.s32.totalorder %s11, 0
    %p31 = por %p29, %p30
    %p32 = scmp.ne.s32.totalorder %s21, %s24
    %p33 = scmp.eq.s32.totalorder %s16, 1
    %p34 = por %p32, %p33
    %p35 = scmp.ne.s32.totalorder %s24, %s25
    %p36 = scmp.eq.s32.totalorder %s16, 0
    %p37 = por %p35, %p36
    %p38 = scmp.ne.s32.totalorder %s24, %s25
    %p39 = scmp.eq.s32.totalorder %s17, 1
    %p40 = por %p38, %p39
    %p42 = scmp.ne.s32.totalorder %s25, %s41
    %p43 = scmp.eq.s32.totalorder %s17, 0
    %p44 = por %p42, %p43
    %s46 = sadd.s32 %s45, 1
    %p49 = scmp.eq.s32.totalorder %s11, 1
    %p50 = scmp.ne.s32.totalorder %s45, %s47
    %p51 = scmp.eq.s32.totalorder %s11, 0
    %p52 = por %p50, %p51
    %p53 = scmp.ne.s32.totalorder %s45, %s47
    %p54 = scmp.eq.s32.totalorder %s16, 1
    %p55 = por %p53, %p54
    %p56 = scmp.ne.s32.totalorder %s47, %s48
    %p57 = scmp.eq.s32.totalorder %s16, 0
    %p58 = por %p56, %p57
    %p59 = scmp.ne.s32.totalorder %s47, %s48
    %p60 = scmp.eq.s32.totalorder %s17, 1
    %p61 = por %p59, %p60
    %p63 = scmp.ne.s32.totalorder %s48, %s62
    %p64 = scmp.eq.s32.totalorder %s17, 0
    %p65 = por %p63, %p64
    %s67 = sadd.s32 %s66, 1
    %p70 = scmp.eq.s32.totalorder %s11, 1
    %p71 = scmp.ne.s32.totalorder %s66, %s68
    %p72 = scmp.eq.s32.totalorder %s11, 0
    %p73 = por %p71, %p72
    %p74 = scmp.ne.s32.totalorder %s66, %s68
    %p75 = scmp.eq.s32.totalorder %s16, 1
    %p76 = por %p74, %p75
    %p77 = scmp.ne.s32.totalorder %s68, %s69
    %p78 = scmp.eq.s32.totalorder %s16, 0
    %p79 = por %p77, %p78
    %p80 = scmp.ne.s32.totalorder %s68, %s69
    %p81 = scmp.eq.s32.totalorder %s17, 1
    %p82 = por %p80, %p81
    %p84 = scmp.ne.s32.totalorder %s69, %s83
    %p85 = scmp.eq.s32.totalorder %s17, 0
    %p86 = por %p84, %p85
    %s88 = sadd.s32 %s87, 1
    %p91 = scmp.eq.s32.totalorder %s11, 1
    %p92 = scmp.ne.s32.totalorder %s87, %s89
    %p93 = scmp.eq.s32.totalorder %s11, 0
    %p94 = por %p92, %p93
    %p95 = scmp.ne.s32.totalorder %s87, %s89
    %p96 = scmp.eq.s32.totalorder %s16, 1
    %p97 = por %p95, %p96
    %p98 = scmp.ne.s32.totalorder %s89, %s90
    %p99 = scmp.eq.s32.totalorder %s16, 0
    %p100 = por %p98, %p99
    %p101 = scmp.ne.s32.totalorder %s89, %s90
    %p102 = scmp.eq.s32.totalorder %s17, 1
    %p103 = por %p101, %p102
    %p105 = scmp.ne.s32.totalorder %s90, %s104
    %p106 = scmp.eq.s32.totalorder %s17, 0
    %p107 = por %p105, %p106
    %s109 = sadd.s32 %s108, 1
    %p112 = scmp.eq.s32.totalorder %s11, 1
    %p113 = scmp.ne.s32.totalorder %s108, %s110
    %p114 = scmp.eq.s32.totalorder %s11, 0
    %p115 = por %p113, %p114
    %p116 = scmp.ne.s32.totalorder %s108, %s110
    %p117 = scmp.eq.s32.totalorder %s16, 1
    %p118 = por %p116, %p117
    %p119 = scmp.ne.s32.totalorder %s110, %s111
    %p120 = scmp.eq.s32.totalorder %s16, 0
    %p121 = por %p119, %p120
    %p122 = scmp.ne.s32.totalorder %s110, %s111
    %p123 = scmp.eq.s32.totalorder %s17, 1
    %p124 = por %p122, %p123
    %p126 = scmp.ne.s32.totalorder %s111, %s125
    %p127 = scmp.eq.s32.totalorder %s17, 0
    %p128 = por %p126, %p127
    %s129 = ssub.s32 %s11, %s18
    %p130 = scmp.eq.s32.totalorder %s129, 0
    %s132 = sadd.s32 %s131, 1
    %s133 = scalar_select %p130, %s131, %s132
    %p136 = pneg %p130
    %p137 = scmp.eq.s32.totalorder %s11, 1
    %p138 = por %p136, %p137
    %p139 = scmp.ne.s32.totalorder %s131, %s134
    %p140 = scmp.eq.s32.totalorder %s11, 0
    %p141 = por %p139, %p140
    %p142 = scmp.ne.s32.totalorder %s131, %s134
    %p143 = scmp.eq.s32.totalorder %s16, 1
    %p144 = por %p142, %p143
    %p145 = scmp.ne.s32.totalorder %s134, %s135
    %p146 = scmp.eq.s32.totalorder %s16, 0
    %p147 = por %p145, %p146
    %p148 = scmp.ne.s32.totalorder %s134, %s135
    %p149 = scmp.eq.s32.totalorder %s17, 1
    %p150 = por %p148, %p149
    %p152 = scmp.ne.s32.totalorder %s135, %s151
    %p153 = scmp.eq.s32.totalorder %s17, 0
    %p154 = por %p152, %p153
    %p155 = scmp.le.s32.totalorder 1, %s11
    %p156 = scmp.lt.s32.totalorder %s11, 3
    %p157 = pnand %p155, %p156
    %p158 = pneg %p157
    // Predicated region
    $region9: #{change_head_forward.1} parent=5 // pred_check
      _
    $region10: #{change_head_forward.1} parent=5 // pred_check_branch
      %160 = sbr.rel (%p157) target = $region12
    $region11: #{change_head_forward.1} parent=5 // pred_region
      %s161 = ssub.s32 %s11, 1
      // Predicated region
      $region13: #{change_head_forward.1} parent=11 // pred_check
        %p162 = pneg %p58
      $region14: #{change_head_forward.1} parent=11 // pred_check_branch
        %164 = sbr.rel (%p162) target = $region16
      $region15: #{change_head_forward.1} parent=11 // pred_region
        _
      $region16: #{change_head_forward.1} parent=11 // pred_fallthru
        _
      // Predicated region
      $region17: #{change_head_forward.1} parent=11 // pred_check
        %p165 = pneg %p79
      $region18: #{change_head_forward.1} parent=11 // pred_check_branch
        %167 = sbr.rel (%p165) target = $region20
      $region19: #{change_head_forward.1} parent=11 // pred_region
        _
      $region20: #{change_head_forward.1} parent=11 // pred_fallthru
        _
      // Predicated region
      $region21: #{change_head_forward.1} parent=11 // pred_check
        %p168 = pneg %p100
      $region22: #{change_head_forward.1} parent=11 // pred_check_branch
        %170 = sbr.rel (%p168) target = $region24
      $region23: #{change_head_forward.1} parent=11 // pred_region
        _
      $region24: #{change_head_forward.1} parent=11 // pred_fallthru
        _
      // Predicated region
      $region25: #{change_head_forward.1} parent=11 // pred_check
        %p171 = pneg %p121
      $region26: #{change_head_forward.1} parent=11 // pred_check_branch
        %173 = sbr.rel (%p171) target = $region28
      $region27: #{change_head_forward.1} parent=11 // pred_region
        _
      $region28: #{change_head_forward.1} parent=11 // pred_fallthru
        _
    $region12: #{change_head_forward.1} parent=5 // pred_fallthru
      _
    %p174 = scmp.lt.s32.totalorder %s11, 2
    // Predicated region
    $region29: #{change_head_forward.1} parent=5 // pred_check
      %p175 = pneg %p174
    $region30: #{change_head_forward.1} parent=5 // pred_check_branch
      %177 = sbr.rel (%p175) target = $region32
    $region31: #{change_head_forward.1} parent=5 // pred_region
      // Predicated region
      $region33: #{change_head_forward.1} parent=31 // pred_check
        %p178 = pneg %p31
      $region34: #{change_head_forward.1} parent=31 // pred_check_branch
        %180 = sbr.rel (%p178) target = $region36
      $region35: #{change_head_forward.1} parent=31 // pred_region
        %p181 = scmp.lt.s32.totalorder %s11, 1
        %s182 = scalar_select %p181, %s11, 1
        %s183 = smul.addr %s182, 3
        %s184 = smul.addr %s183, 4
        %s185 = scalar_lea.vmem %s0, %s184
      $region36: #{change_head_forward.1} parent=31 // pred_fallthru
        _
    $region32: #{change_head_forward.1} parent=5 // pred_fallthru
      _
    %p186 = scmp.le.s32.totalorder 1, %s11
    %p187 = scmp.lt.s32.totalorder %s11, 3
    %p188 = pnand %p186, %p187
    %p189 = pneg %p188
    // Predicated region
    $region37: #{change_head_forward.1} parent=5 // pred_check
      _
    $region38: #{change_head_forward.1} parent=5 // pred_check_branch
      %191 = sbr.rel (%p188) target = $region40
    $region39: #{change_head_forward.1} parent=5 // pred_region
      %s192 = ssub.s32 %s11, 1
      %p193 = scmp.lt.s32.totalorder %s16, 1
      %s194 = scalar_select %p193, %s16, 1
      %s195 = smul.addr %s194, 3
      %s196 = smul.addr %s195, 4
      %s197 = scalar_lea.vmem %s0, %s196
      %p198 = pneg %p37
      %p199 = pneg %p34
      %p200 = pneg %p58
      %p201 = pneg %p55
      %p202 = pneg %p79
      %p203 = pneg %p76
      %p204 = pneg %p100
      %p205 = pneg %p97
      %p206 = pneg %p121
      %p207 = pneg %p118
      %p208 = pneg %p147
      %p209 = pneg %p144
      %p210 = scmp.lt.s32.totalorder %s16, 1
      %s211 = scalar_select %p210, %s16, 1
      %s212 = smul.addr %s211, 4
      %s213 = smul.addr %s212, 4
      %s214 = scalar_lea.vmem %s5, %s213
      %p215 = scmp.lt.s32.totalorder %s16, 1
      %s216 = scalar_select %p215, %s16, 1
      %s217 = smul.addr %s216, 3
      %s218 = smul.addr %s217, 4
      %s219 = scalar_lea.vmem %s0, %s218
      %p220 = scmp.lt.s32.totalorder %s16, 1
      %s221 = scalar_select %p220, %s16, 1
      %s222 = smul.addr %s221, 4
      %s223 = smul.addr %s222, 4
      %s224 = scalar_lea.vmem %s5, %s223
      %v226 = vld [vmem:[%s219] sm:$0xf]
      %v227 = vld [vmem:[%s219 + $0x4] sm:$0xf]
      %v228 = vld [vmem:[%s1] sm:$0xf]
      %v229 = vld [vmem:[%s1 + $0x4] sm:$0xf]
      %v230 = vld [vmem:[%s1 + $0x8] sm:$0xf]
      %v231 = vld [vmem:[%s1 + $0xc] sm:$0xf]
      %v232 = vld [vmem:[%s1 + $0x10] sm:$0xf]
      %v233 = vld [vmem:[%s1 + $0x14] sm:$0xf]
      %v234 = vld [vmem:[%s1 + $0x18] sm:$0xf]
      %v235 = vld [vmem:[%s1 + $0x1c] sm:$0xf]
      %v236 = vld [vmem:[%s1 + $0x20] sm:$0xf]
      %v237 = vld [vmem:[%s219 + $0x8] sm:$0x1]
      %s238 = scalar_lea.vmem %s1, 36
      %v239 = vld [vmem:[%s238] sm:$0xf]
      %v240 = vld [vmem:[%s238 + $0x4] sm:$0xf]
      %v241 = vld [vmem:[%s238 + $0x8] sm:$0xf]
      %v242 = vld [vmem:[%s238 + $0xc] sm:$0xf]
      %v243 = vld [vmem:[%s238 + $0x10] sm:$0xf]
      %v244 = vld [vmem:[%s238 + $0x14] sm:$0xf]
      %v245 = vld [vmem:[%s238 + $0x18] sm:$0xf]
      %v246 = vld [vmem:[%s238 + $0x1c] sm:$0xf]
      %v247 = vld [vmem:[%s238 + $0x20] sm:$0xf]
      %v251 = vunpack.c.l.b16 %v226
      %v252 = vunpack.c.l.b16 %v227
      %v253 = vunpack.c.l.b16 %v237
      %v254 = vpack.c.b16 %v252, %v251
      %v255 = vpack.c.b16 %v253, %v253
      %vm256 = vsmask.f32 7424
      %v258 = vshrl.u32 %v254, 16
      %v260 = vshll.u32 %v254, 16
      %v262 = vrot.slane %v260, 1
      %v263 = vor.u32 %v258, %v262
      %v265 = vshll.u32 %v255, 16
      %v267 = vrot.slane %v265, 1
      %v268 = vsel %vm256, %v263, %v267
      %v278 = vunpack.c.l.b16 %v239
      %v279 = vunpack.c.l.b16 %v240
      %v280 = vunpack.c.l.b16 %v241
      %v281 = vunpack.c.l.b16 %v242
      %v282 = vunpack.c.l.b16 %v243
      %v283 = vunpack.c.l.b16 %v244
      %v284 = vunpack.c.l.b16 %v245
      %v285 = vunpack.c.l.b16 %v246
      %v286 = vunpack.c.l.b16 %v247
      %v287 = vpack.c.b16 %v279, %v278
      %v288 = vpack.c.b16 %v281, %v280
      %v289 = vpack.c.b16 %v283, %v282
      %v290 = vpack.c.b16 %v285, %v284
      %v291 = vpack.c.b16 %v286, %v286
      %vm296 = vcmask 588800
      %v298 = vsel %vm296, %v268, 0
      %vm300 = vcmask 1043456
      %v302 = vsel %vm300, %v291, 0
      %304 = vmatprep.subr.bf16.mxu0 0
      %305 = vmatpush1.bf16.msra.mxu0 0
      %306 = vmatprep.subr.bf16.mxu0 0
      %307 = vmatpush1.bf16.msra.mxu0 0
      %308 = vmatprep.subr.bf16.mxu0 0
      %309 = vmatpush1.bf16.msra.mxu0 0
      %310 = vmatprep.subr.bf16.mxu0 0
      %311 = vmatpush1.bf16.msra.mxu0 %v302
      %312 = vmatprep.subr.bf16.mxu0 0
      %313 = vmatpush1.bf16.msra.mxu0 %v290
      %314 = vmatprep.subr.bf16.mxu0 0
      %315 = vmatpush1.bf16.msra.mxu0 %v289
      %316 = vmatprep.subr.bf16.mxu0 0
      %317 = vmatpush1.bf16.msra.mxu0 %v288
      %318 = vmatprep.subr.bf16.mxu0 0
      %319 = vmatpush1.bf16.msra.mxu0 %v287
      %320 = vmatprep.subr.bf16.mxu0 0
      %321 = vmatpush2.bf16.msra.mxu0 0
      %322 = vmatprep.subr.bf16.mxu0 0
      %323 = vmatpush2.bf16.msra.mxu0 0
      %324 = vmatprep.subr.bf16.mxu0 0
      %325 = vmatpush2.bf16.msra.mxu0 0
      %326 = vmatprep.subr.bf16.mxu0 0
      %327 = vmatpush2.bf16.msra.mxu0 0
      %328 = vmatprep.subr.bf16.mxu0 0
      %329 = vmatpush2.bf16.msra.mxu0 0
      %330 = vmatprep.subr.bf16.mxu0 0
      %331 = vmatpush2.bf16.msra.mxu0 0
      %332 = vmatprep.subr.bf16.mxu0 0
      %333 = vmatpush2.bf16.msra.mxu0 0
      %334 = vmatprep.subr.bf16.mxu0 0
      %335 = vmatpush2.bf16.msra.mxu0 0
      %336 = vmatprep.mubr.bf16.mxu0 0
      %337 = vmatmul.mubr.bf16.gmra.mxu0 %v298
      %v338 = vpop.f32.mrf.mxu0
      %v339 = vadd.f32 0.0, %v338
      %v340 = vpop.f32.mrf.mxu0
      %v341 = vpop.f32.mrf.mxu0
      %v342 = vadd.f32 0.0, %v341
      %v343 = vpop.f32.mrf.mxu0
      %344 = vdwg.mxu0
      %v354 = vunpack.c.l.b16 %v228
      %v355 = vunpack.c.l.b16 %v229
      %v356 = vunpack.c.l.b16 %v230
      %v357 = vunpack.c.l.b16 %v231
      %v358 = vunpack.c.l.b16 %v232
      %v359 = vunpack.c.l.b16 %v233
      %v360 = vunpack.c.l.b16 %v234
      %v361 = vunpack.c.l.b16 %v235
      %v362 = vunpack.c.l.b16 %v236
      %v363 = vpack.c.b16 %v355, %v354
      %v364 = vpack.c.b16 %v357, %v356
      %v365 = vpack.c.b16 %v359, %v358
      %v366 = vpack.c.b16 %v361, %v360
      %v367 = vpack.c.b16 %v362, %v362
      %v372 = vsel %vm296, %v254, 0
      %v375 = vsel %vm300, %v367, 0
      %377 = vmatprep.subr.bf16.mxu0 0
      %378 = vmatpush1.bf16.msra.mxu0 0
      %379 = vmatprep.subr.bf16.mxu0 0
      %380 = vmatpush1.bf16.msra.mxu0 0
      %381 = vmatprep.subr.bf16.mxu0 0
      %382 = vmatpush1.bf16.msra.mxu0 0
      %383 = vmatprep.subr.bf16.mxu0 0
      %384 = vmatpush1.bf16.msra.mxu0 %v375
      %385 = vmatprep.subr.bf16.mxu0 0
      %386 = vmatpush1.bf16.msra.mxu0 %v366
      %387 = vmatprep.subr.bf16.mxu0 0
      %388 = vmatpush1.bf16.msra.mxu0 %v365
      %389 = vmatprep.subr.bf16.mxu0 0
      %390 = vmatpush1.bf16.msra.mxu0 %v364
      %391 = vmatprep.subr.bf16.mxu0 0
      %392 = vmatpush1.bf16.msra.mxu0 %v363
      %393 = vmatprep.subr.bf16.mxu0 0
      %394 = vmatpush2.bf16.msra.mxu0 0
      %395 = vmatprep.subr.bf16.mxu0 0
      %396 = vmatpush2.bf16.msra.mxu0 0
      %397 = vmatprep.subr.bf16.mxu0 0
      %398 = vmatpush2.bf16.msra.mxu0 0
      %399 = vmatprep.subr.bf16.mxu0 0
      %400 = vmatpush2.bf16.msra.mxu0 0
      %401 = vmatprep.subr.bf16.mxu0 0
      %402 = vmatpush2.bf16.msra.mxu0 0
      %403 = vmatprep.subr.bf16.mxu0 0
      %404 = vmatpush2.bf16.msra.mxu0 0
      %405 = vmatprep.subr.bf16.mxu0 0
      %406 = vmatpush2.bf16.msra.mxu0 0
      %407 = vmatprep.subr.bf16.mxu0 0
      %408 = vmatpush2.bf16.msra.mxu0 0
      %409 = vmatprep.mubr.bf16.mxu0 0
      %410 = vmatmul.mubr.bf16.gmra.mxu0 %v372
      %v411 = vpop.f32.mrf.mxu0
      %v412 = vadd.f32 %v339, %v411
      %v413 = vpop.f32.mrf.mxu0
      %v414 = vpop.f32.mrf.mxu0
      %v415 = vadd.f32 %v342, %v414
      %v416 = vpop.f32.mrf.mxu0
      %417 = vdwg.mxu0
      %v418 = vld [vmem:[%s219] sm:$0xe]
      %s419 = scalar_lea.vmem %s1, 72
      %v420 = vld [vmem:[%s419] sm:$0xf]
      %v421 = vld [vmem:[%s419 + $0x4] sm:$0xf]
      %v422 = vld [vmem:[%s419 + $0x8] sm:$0xf]
      %v423 = vld [vmem:[%s419 + $0xc] sm:$0xf]
      %v424 = vld [vmem:[%s419 + $0x10] sm:$0xf]
      %v425 = vld [vmem:[%s419 + $0x14] sm:$0xf]
      %v426 = vld [vmem:[%s419 + $0x18] sm:$0xf]
      %v427 = vld [vmem:[%s419 + $0x1c] sm:$0xf]
      %v428 = vld [vmem:[%s419 + $0x20] sm:$0xf]
      %v430 = vunpack.c.l.b16 %v418
      %v431 = vpack.c.b16 %v252, %v430
      %vm432 = vcmask 1046528
      %v433 = vrot.slane %v431, 1
      %v434 = vrot.slane %v255, 1
      %v435 = vsel %vm432, %v433, %v434
      %v445 = vunpack.c.l.b16 %v420
      %v446 = vunpack.c.l.b16 %v421
      %v447 = vunpack.c.l.b16 %v422
      %v448 = vunpack.c.l.b16 %v423
      %v449 = vunpack.c.l.b16 %v424
      %v450 = vunpack.c.l.b16 %v425
      %v451 = vunpack.c.l.b16 %v426
      %v452 = vunpack.c.l.b16 %v427
      %v453 = vunpack.c.l.b16 %v428
      %v454 = vpack.c.b16 %v446, %v445
      %v455 = vpack.c.b16 %v448, %v447
      %v456 = vpack.c.b16 %v450, %v449
      %v457 = vpack.c.b16 %v452, %v451
      %v458 = vpack.c.b16 %v453, %v453
      %v464 = vsel %vm296, %v435, 0
      %v467 = vsel %vm300, %v458, 0
      %469 = vmatprep.subr.bf16.mxu0 0
      %470 = vmatpush1.bf16.msra.mxu0 0
      %471 = vmatprep.subr.bf16.mxu0 0
      %472 = vmatpush1.bf16.msra.mxu0 0
      %473 = vmatprep.subr.bf16.mxu0 0
      %474 = vmatpush1.bf16.msra.mxu0 0
      %475 = vmatprep.subr.bf16.mxu0 0
      %476 = vmatpush1.bf16.msra.mxu0 %v467
      %477 = vmatprep.subr.bf16.mxu0 0
      %478 = vmatpush1.bf16.msra.mxu0 %v457
      %479 = vmatprep.subr.bf16.mxu0 0
      %480 = vmatpush1.bf16.msra.mxu0 %v456
      %481 = vmatprep.subr.bf16.mxu0 0
      %482 = vmatpush1.bf16.msra.mxu0 %v455
      %483 = vmatprep.subr.bf16.mxu0 0
      %484 = vmatpush1.bf16.msra.mxu0 %v454
      %485 = vmatprep.subr.bf16.mxu0 0
      %486 = vmatpush2.bf16.msra.mxu0 0
      %487 = vmatprep.subr.bf16.mxu0 0
      %488 = vmatpush2.bf16.msra.mxu0 0
      %489 = vmatprep.subr.bf16.mxu0 0
      %490 = vmatpush2.bf16.msra.mxu0 0
      %491 = vmatprep.subr.bf16.mxu0 0
      %492 = vmatpush2.bf16.msra.mxu0 0
      %493 = vmatprep.subr.bf16.mxu0 0
      %494 = vmatpush2.bf16.msra.mxu0 0
      %495 = vmatprep.subr.bf16.mxu0 0
      %496 = vmatpush2.bf16.msra.mxu0 0
      %497 = vmatprep.subr.bf16.mxu0 0
      %498 = vmatpush2.bf16.msra.mxu0 0
      %499 = vmatprep.subr.bf16.mxu0 0
      %500 = vmatpush2.bf16.msra.mxu0 0
      %501 = vmatprep.mubr.bf16.mxu0 0
      %502 = vmatmul.mubr.bf16.gmra.mxu0 %v464
      %v503 = vpop.f32.mrf.mxu0
      %v504 = vadd.f32 0.0, %v503
      %v505 = vpop.f32.mrf.mxu0
      %v506 = vpop.f32.mrf.mxu0
      %v507 = vadd.f32 0.0, %v506
      %v508 = vpop.f32.mrf.mxu0
      %509 = vdwg.mxu0
      %v510 = vadd.f32 %v412, %v504
      %v511 = vadd.f32 %v415, %v507
      %v512 = vld [vmem:[%s2] sm:$0x1]
      %v514 = vlaneseq
      %v515 = vshrl.u32 %v514, 7
      %v516 = vsub.s32 0, %v515
      %v517 = vrot.slane %v512, %v516
      %v519 = vadd.f32 %v510, %v517
      %v520 = vadd.f32 %v511, %v517
      %v521 = vmax.f32 %v519, 0.0
      %v522 = vmax.f32 %v520, 0.0
      %v523 = vpack.c.bf16 %v522, %v521
      %v524 = vld [vmem:[%s3] sm:$0xff]
      %v525 = vld [vmem:[%s3 + $0x8] sm:$0xff]
      %v526 = vld [vmem:[%s3 + $0x10] sm:$0xff]
      %v527 = vld [vmem:[%s3 + $0x18] sm:$0xff]
      %v528 = vld [vmem:[%s3 + $0x20] sm:$0xff]
      %v529 = vld [vmem:[%s3 + $0x28] sm:$0xff]
      %v530 = vld [vmem:[%s3 + $0x30] sm:$0xff]
      %v531 = vld [vmem:[%s3 + $0x38] sm:$0xff]
      %v532 = vld [vmem:[%s3 + $0x40] sm:$0xff]
      %v533 = vld [vmem:[%s3 + $0x48] sm:$0xff]
      %v534 = vld [vmem:[%s3 + $0x50] sm:$0xff]
      %v535 = vld [vmem:[%s3 + $0x58] sm:$0xff]
      %v536 = vld [vmem:[%s3 + $0x60] sm:$0xff]
      %v537 = vld [vmem:[%s3 + $0x68] sm:$0xff]
      %v538 = vld [vmem:[%s3 + $0x70] sm:$0xff]
      %v539 = vld [vmem:[%s3 + $0x78] sm:$0xff]
      %v540 = vld [vmem:[%s4] sm:$0x3]
      %v542 = vlaneseq
      %v543 = vshrl.u32 %v542, 7
      %v544 = vsub.s32 0, %v543
      %v545 = vrot.slane %v540, %v544
      %v546 = vlaneseq
      %v547 = vshrl.u32 %v546, 7
      %v548 = vsub.s32 1, %v547
      %v549 = vrot.slane %v540, %v548
      %v568 = vunpack.c.l.b16 %v524
      %v569 = vunpack.c.h.b16 %v524
      %v570 = vunpack.c.l.b16 %v525
      %v571 = vunpack.c.h.b16 %v525
      %v572 = vunpack.c.l.b16 %v526
      %v573 = vunpack.c.h.b16 %v526
      %v574 = vunpack.c.l.b16 %v527
      %v575 = vunpack.c.h.b16 %v527
      %v576 = vunpack.c.l.b16 %v528
      %v577 = vunpack.c.h.b16 %v528
      %v578 = vunpack.c.l.b16 %v529
      %v579 = vunpack.c.h.b16 %v529
      %v580 = vunpack.c.l.b16 %v530
      %v581 = vunpack.c.h.b16 %v530
      %v582 = vunpack.c.l.b16 %v531
      %v583 = vunpack.c.h.b16 %v531
      %v584 = vunpack.c.l.b16 %v532
      %v585 = vunpack.c.h.b16 %v532
      %v586 = vunpack.c.l.b16 %v533
      %v587 = vunpack.c.h.b16 %v533
      %v588 = vunpack.c.l.b16 %v534
      %v589 = vunpack.c.h.b16 %v534
      %v590 = vunpack.c.l.b16 %v535
      %v591 = vunpack.c.h.b16 %v535
      %v592 = vunpack.c.l.b16 %v536
      %v593 = vunpack.c.h.b16 %v536
      %v594 = vunpack.c.l.b16 %v537
      %v595 = vunpack.c.h.b16 %v537
      %v596 = vunpack.c.l.b16 %v538
      %v597 = vunpack.c.h.b16 %v538
      %v598 = vunpack.c.l.b16 %v539
      %v599 = vunpack.c.h.b16 %v539
      %v600 = vpack.c.b16 %v570, %v568
      %v601 = vpack.c.b16 %v571, %v569
      %v602 = vpack.c.b16 %v574, %v572
      %v603 = vpack.c.b16 %v575, %v573
      %v604 = vpack.c.b16 %v578, %v576
      %v605 = vpack.c.b16 %v579, %v577
      %v606 = vpack.c.b16 %v582, %v580
      %v607 = vpack.c.b16 %v583, %v581
      %v608 = vpack.c.b16 %v586, %v584
      %v609 = vpack.c.b16 %v587, %v585
      %v610 = vpack.c.b16 %v590, %v588
      %v611 = vpack.c.b16 %v591, %v589
      %v612 = vpack.c.b16 %v594, %v592
      %v613 = vpack.c.b16 %v595, %v593
      %v614 = vpack.c.b16 %v598, %v596
      %v615 = vpack.c.b16 %v599, %v597
      %632 = vmatprep.subr.bf16.mxu0 %v615
      %633 = vmatpush1.bf16.msra.mxu0 %v614
      %634 = vmatprep.subr.bf16.mxu0 %v613
      %635 = vmatpush1.bf16.msra.mxu0 %v612
      %636 = vmatprep.subr.bf16.mxu0 %v611
      %637 = vmatpush1.bf16.msra.mxu0 %v610
      %638 = vmatprep.subr.bf16.mxu0 %v609
      %639 = vmatpush1.bf16.msra.mxu0 %v608
      %640 = vmatprep.subr.bf16.mxu0 %v607
      %641 = vmatpush1.bf16.msra.mxu0 %v606
      %642 = vmatprep.subr.bf16.mxu0 %v605
      %643 = vmatpush1.bf16.msra.mxu0 %v604
      %644 = vmatprep.subr.bf16.mxu0 %v603
      %645 = vmatpush1.bf16.msra.mxu0 %v602
      %646 = vmatprep.subr.bf16.mxu0 %v601
      %647 = vmatpush1.bf16.msra.mxu0 %v600
      %648 = vmatprep.subr.bf16.mxu0 0
      %649 = vmatpush2.bf16.msra.mxu0 0
      %650 = vmatprep.subr.bf16.mxu0 0
      %651 = vmatpush2.bf16.msra.mxu0 0
      %652 = vmatprep.subr.bf16.mxu0 0
      %653 = vmatpush2.bf16.msra.mxu0 0
      %654 = vmatprep.subr.bf16.mxu0 0
      %655 = vmatpush2.bf16.msra.mxu0 0
      %656 = vmatprep.subr.bf16.mxu0 0
      %657 = vmatpush2.bf16.msra.mxu0 0
      %658 = vmatprep.subr.bf16.mxu0 0
      %659 = vmatpush2.bf16.msra.mxu0 0
      %660 = vmatprep.subr.bf16.mxu0 0
      %661 = vmatpush2.bf16.msra.mxu0 0
      %662 = vmatprep.subr.bf16.mxu0 0
      %663 = vmatpush2.bf16.msra.mxu0 0
      %664 = vmatprep.mubr.bf16.mxu0 0
      %665 = vmatmul.mubr.bf16.gmra.mxu0 %v523
      %v666 = vpop.f32.mrf.mxu0
      %v667 = vadd.f32 %v545, %v666
      %v668 = vpop.f32.mrf.mxu0
      %v669 = vadd.f32 %v549, %v668
      %v670 = vpop.f32.mrf.mxu0
      %v671 = vadd.f32 %v545, %v670
      %v672 = vpop.f32.mrf.mxu0
      %v673 = vadd.f32 %v549, %v672
      %674 = vdwg.mxu0
      %v675 = vpack.c.bf16 %v671, %v667
      %v676 = vpack.c.bf16 %v673, %v669
      %v679 = vunpack.c.l.b16 %v675
      %v680 = vunpack.c.l.b16 %v676
      %v681 = vunpack.c.h.b16 %v675
      %v682 = vunpack.c.h.b16 %v676
      %v683 = vpack.c.b16 %v680, %v679
      %v684 = vpack.c.b16 %v682, %v681
      %vm687 = vcmask 261124
      %vm688 = vmor %vm687, %vm300
      %689 = vst.msk [vmem:[%s224] sm:$0xff] %vm688, %v683
      %690 = vst.msk [vmem:[%s224 + $0x8] sm:$0xff] %vm688, %v684
      %p691 = scmp.lt.s32.totalorder %s16, 1
      %s692 = scalar_select %p691, %s16, 1
      %s693 = smul.addr %s692, 4
      %s694 = smul.addr %s693, 4
      %s695 = scalar_lea.vmem %s5, %s694
      // Predicated region
      $region41: #{change_head_forward.1} parent=39 // pred_check
        %p696 = pneg %p144
      $region42: #{change_head_forward.1} parent=39 // pred_check_branch
        %698 = sbr.rel (%p696) target = $region44
      $region43: #{change_head_forward.1} parent=39 // pred_region
        _
      $region44: #{change_head_forward.1} parent=39 // pred_fallthru
        _
    $region40: #{change_head_forward.1} parent=5 // pred_fallthru
      _
    %p699 = scmp.le.s32.totalorder 2, %s11
    // Predicated region
    $region45: #{change_head_forward.1} parent=5 // pred_check
      %p700 = pneg %p699
    $region46: #{change_head_forward.1} parent=5 // pred_check_branch
      %702 = sbr.rel (%p700) target = $region48
    $region47: #{change_head_forward.1} parent=5 // pred_region
      %s703 = ssub.s32 %s11, 2
      // Predicated region
      $region49: #{change_head_forward.1} parent=47 // pred_check
        %p704 = pneg %p150
      $region50: #{change_head_forward.1} parent=47 // pred_check_branch
        %706 = sbr.rel (%p704) target = $region52
      $region51: #{change_head_forward.1} parent=47 // pred_region
        %p707 = scmp.lt.s32.totalorder %s17, 1
        %s708 = scalar_select %p707, %s17, 1
        %s709 = smul.addr %s708, 4
        %s710 = smul.addr %s709, 4
        %s711 = scalar_lea.vmem %s5, %s710
      $region52: #{change_head_forward.1} parent=47 // pred_fallthru
        _
    $region48: #{change_head_forward.1} parent=5 // pred_fallthru
      _
  $region6: #{change_head_forward.1} parent=0 // loop_footer
    %s15 = sadd.s32 1, %s11
  $region7: #{change_head_forward.1} parent=0 // loop_footer_branch
    %10 = sbr.rel target = $region3
  $region8: #{change_head_forward.1} parent=0 // loop_exit
    _

</llo_original>
